<compile_context>
chip_gen: v6e
topology: v6e:2x2x1
jax: 0.10.0
libtpu: 0.0.40
codegen_flags: <defaults>
</compile_context>

<pallas_src>
import functools

import jax
import jax.numpy as jnp
from jax.experimental import pallas as pl
from jax.experimental.pallas import tpu as pltpu


def _round_up(x, m):
    return ((x + m - 1) // m) * m


def _top_aspect_kernel(*refs, apply_dropout):
    if apply_dropout:
        (small_ref, cls_ref, word_ref, mask_ref,
         w1_small_ref, w1_cls_ref, w1_word_ref, b1_ref, w2_ref, b2_ref,
         outp_ref, prob_ref) = refs
    else:
        (small_ref, cls_ref, word_ref,
         w1_small_ref, w1_cls_ref, w1_word_ref, b1_ref, w2_ref, b2_ref,
         outp_ref, prob_ref) = refs
        mask_ref = None

    # ---- hid2state: torch.cat fused as 3 partial matmuls, f32 accumulation ----
    h = jnp.dot(cls_ref[...], w1_cls_ref[...], preferred_element_type=jnp.float32)
    h = h + jnp.dot(word_ref[...], w1_word_ref[...],
                    preferred_element_type=jnp.float32)
    h = h + jnp.dot(small_ref[...], w1_small_ref[...],
                    preferred_element_type=jnp.float32)
    h = jnp.tanh(h + b1_ref[...])

    # ---- inverted dropout: pre-scaled mask (0 or 1/(1-p)) -> one VPU multiply ----
    if apply_dropout:
        h = h * mask_ref[...]

    outp_ref[...] = h

    # ---- state2probL + softmax over dim=1 (tiny; kept fused, all f32) ----
    logits = jnp.dot(h, w2_ref[...], preferred_element_type=jnp.float32)
    logits = logits + b2_ref[...]
    m = jnp.max(logits, axis=-1, keepdims=True)
    e = jnp.exp(logits - m)
    prob_ref[...] = e / jnp.sum(e, axis=-1, keepdims=True)


def _dropout_mask(seed, shape, p):
    """Pre-scaled inverted-dropout keep mask: 0 or 1/(1-p)."""
    keep = jax.random.uniform(jax.random.PRNGKey(seed), shape, jnp.float32) >= p
    return keep.astype(jnp.float32) / (1.0 - p)


def top_aspect_forward(pos_vec, bot_bert_cls, aspect_vec, bot_word_vec, memory,
                       params, *, training, dropout, seed=0, block_b=1024):
    """JAX wrapper mirroring TopAspectModel.forward. Returns (outp, prob)."""
    w1, b1, w2, b2 = params
    B = pos_vec.shape[0]
    statedim = w1.shape[1]
    aspect_count = w2.shape[1]

    n_pos = pos_vec.shape[1]
    n_cls = bot_bert_cls.shape[1]
    n_word = bot_word_vec.shape[1]
    n_asp = aspect_vec.shape[1]
    n_mem = memory.shape[1]
    assert w1.shape[0] == n_pos + n_cls + n_word + n_asp + n_mem

    # torch concat order: [pos, bert_cls, word, aspect, memory] -> w1 row offsets.
    o_cls = n_pos
    o_word = o_cls + n_cls
    o_asp = o_word + n_word
    o_mem = o_asp + n_asp

    # Fuse the three tiny segments into one narrow stream + matching w1 rows.
    # The two 1024-wide streams are consumed as-is (f32) — no HBM copy of the
    # dominant traffic; the only wrapper-side copy touches ~300 B/row.
    small = jnp.concatenate([pos_vec, aspect_vec, memory], axis=1).astype(jnp.float32)
    cls_f = bot_bert_cls.astype(jnp.float32)
    word_f = bot_word_vec.astype(jnp.float32)

    w1f = jnp.asarray(w1, jnp.float32)
    w1_small = jnp.concatenate([w1f[:o_cls], w1f[o_asp:o_mem], w1f[o_mem:]], axis=0)
    w1_cls = w1f[o_cls:o_word]
    w1_word = w1f[o_word:o_asp]
    b1f = jnp.asarray(b1, jnp.float32).reshape(1, statedim)
    w2f = jnp.asarray(w2, jnp.float32)
    b2f = jnp.asarray(b2, jnp.float32).reshape(1, aspect_count)

    apply_dropout = bool(training) and float(dropout) > 0.0

    # ---- batch tiling: no padding; ragged last tile handled by Pallas ----
    bb = int(block_b)
    if B <= bb:
        if B >= 512:
            # Keep >=4 tiles when there is enough work so v7x's 2 TensorCores
            # both get batch tiles (megacore sharding of the "parallel" axis).
            bb = _round_up(pl.cdiv(B, 4), 8)
        else:
            bb = B
    grid = (pl.cdiv(B, bb),)

    total_width = small.shape[1] + n_cls + n_word
    weight_bytes = 4 * (w1f.size + b1f.size + w2f.size + b2f.size)
    mask_cols = statedim if apply_dropout else 0
    bytes_per_row = 4 * (total_width + mask_cols + statedim + aspect_count)
    # Explicit VMEM budget: double-buffered streamed tiles + resident weights.
    vmem_limit = int(min(max(2 * bb * bytes_per_row + 2 * weight_bytes + (4 << 20),
                             16 << 20), 32 << 20))

    cost = pl.CostEstimate(
        flops=2 * B * (total_width * statedim + statedim * aspect_count),
        transcendentals=B * (statedim + aspect_count),
        bytes_accessed=B * bytes_per_row + weight_bytes)

    stream_specs = [
        pl.BlockSpec((bb, small.shape[1]), lambda i: (i, 0)),
        pl.BlockSpec((bb, n_cls), lambda i: (i, 0)),
        pl.BlockSpec((bb, n_word), lambda i: (i, 0)),
    ]
    inputs = [small, cls_f, word_f]
    if apply_dropout:
        # TODO(synk): switch to in-kernel pltpu.prng_* HW dropout once those
        # primitives lower outside a real Mosaic compile; RNG stream differs
        # from torch either way (inverted-dropout semantics are identical).
        inputs.append(_dropout_mask(seed, (B, statedim), float(dropout)))
        stream_specs.append(pl.BlockSpec((bb, statedim), lambda i: (i, 0)))

    resident = [w1_small, w1_cls, w1_word, b1f, w2f, b2f]
    resident_specs = [pl.BlockSpec(a.shape, lambda i: (0, 0)) for a in resident]

    outp, prob = pl.pallas_call(
        functools.partial(_top_aspect_kernel, apply_dropout=apply_dropout),
        out_shape=(jax.ShapeDtypeStruct((B, statedim), jnp.float32),
                   jax.ShapeDtypeStruct((B, aspect_count), jnp.float32)),
        grid=grid,
        in_specs=stream_specs + resident_specs,
        out_specs=(pl.BlockSpec((bb, statedim), lambda i: (i, 0)),
                   pl.BlockSpec((bb, aspect_count), lambda i: (i, 0))),
        compiler_params=pltpu.CompilerParams(
            dimension_semantics=("parallel",),
            vmem_limit_bytes=vmem_limit),
        cost_estimate=cost,
    )(*inputs, *resident)
    return outp, prob


def init_params(key, dim, statedim, aspect_count):
    """Deterministic torch.nn.Linear-style init (uniform +-1/sqrt(fan_in))."""
    in1 = dim + statedim + 1024 * 2 + 25
    k1, k2, k3, k4 = jax.random.split(key, 4)
    lim1 = 1.0 / jnp.sqrt(in1)
    lim2 = 1.0 / jnp.sqrt(statedim)
    w1 = jax.random.uniform(k1, (in1, statedim), jnp.float32, -lim1, lim1)
    b1 = jax.random.uniform(k2, (1, statedim), jnp.float32, -lim1, lim1)
    w2 = jax.random.uniform(k3, (statedim, aspect_count), jnp.float32, -lim2, lim2)
    b2 = jax.random.uniform(k4, (1, aspect_count), jnp.float32, -lim2, lim2)
    return (w1, b1, w2, b2)


def reference_forward(pos_vec, bot_bert_cls, aspect_vec, bot_word_vec, memory,
                      params):
    """Pure-jnp f32 reference (training=False path)."""
    w1, b1, w2, b2 = params
    hp = jax.lax.Precision.HIGHEST
    inp = jnp.concatenate(
        [pos_vec, bot_bert_cls, bot_word_vec, aspect_vec, memory], axis=1)
    outp = jnp.tanh(jnp.dot(inp, w1, precision=hp) + b1)
    prob = jax.nn.softmax(jnp.dot(outp, w2, precision=hp) + b2, axis=1)
    return outp, prob


if __name__ == "__main__":
    dim, statedim, aspect_count = 32, 16, 8
    B = 4

    key = jax.random.PRNGKey(0)
    kp, kx = jax.random.split(key)
    params = init_params(kp, dim, statedim, aspect_count)

    k1, k2, k3, k4, k5 = jax.random.split(kx, 5)
    pos_vec = jax.random.normal(k1, (B, 25), jnp.float32)
    bot_bert_cls = jax.random.normal(k2, (B, 1024), jnp.float32)
    aspect_vec = jax.random.normal(k3, (B, dim), jnp.float32)
    bot_word_vec = jax.random.normal(k4, (B, 1024), jnp.float32)
    memory = jax.random.normal(k5, (B, statedim), jnp.float32)

    # ---- inference path vs f32 reference ----
    outp, prob = top_aspect_forward(
        pos_vec, bot_bert_cls, aspect_vec, bot_word_vec, memory, params,
        training=False, dropout=0.5)
    jax.block_until_ready((outp, prob))

    ref_outp, ref_prob = reference_forward(
        pos_vec, bot_bert_cls, aspect_vec, bot_word_vec, memory, params)
    assert outp.shape == (B, statedim) and prob.shape == (B, aspect_count)
    assert jnp.allclose(outp, ref_outp, atol=2e-2, rtol=2e-2)
    assert jnp.allclose(prob, ref_prob, atol=2e-2, rtol=2e-2)
    assert jnp.allclose(jnp.sum(prob, axis=1), 1.0, atol=1e-4)

    # ---- training/dropout path: exact mask reproduction check ----
    seed = 123
    p = 0.5
    outp_t, prob_t = top_aspect_forward(
        pos_vec, bot_bert_cls, aspect_vec, bot_word_vec, memory, params,
        training=True, dropout=p, seed=seed)
    jax.block_until_ready((outp_t, prob_t))

    mask = _dropout_mask(seed, (B, statedim), p)
    exp_outp = ref_outp * mask
    exp_prob = jax.nn.softmax(
        jnp.dot(exp_outp, params[2], precision=jax.lax.Precision.HIGHEST)
        + params[3], axis=1)
    assert jnp.allclose(outp_t, exp_outp, atol=3e-2, rtol=3e-2)
    assert jnp.allclose(prob_t, exp_prob, atol=3e-2, rtol=3e-2)
    assert jnp.all(jnp.isfinite(prob_t))
    assert jnp.allclose(jnp.sum(prob_t, axis=1), 1.0, atol=1e-4)

    print("KERNEL_OK")
</pallas_src>

<mosaic_0001>
module attributes {stable_mosaic.version = 11 : i64} {
  func.func @_top_aspect_kernel(%arg0: i32, %arg1: memref<4x73xf32, #tpu.memory_space<vmem>>, %arg2: memref<4x1024xf32, #tpu.memory_space<vmem>>, %arg3: memref<4x1024xf32, #tpu.memory_space<vmem>>, %arg4: memref<73x16xf32, #tpu.memory_space<vmem>>, %arg5: memref<1024x16xf32, #tpu.memory_space<vmem>>, %arg6: memref<1024x16xf32, #tpu.memory_space<vmem>>, %arg7: memref<1x16xf32, #tpu.memory_space<vmem>>, %arg8: memref<16x8xf32, #tpu.memory_space<vmem>>, %arg9: memref<1x8xf32, #tpu.memory_space<vmem>>, %arg10: memref<4x16xf32, #tpu.memory_space<vmem>>, %arg11: memref<4x8xf32, #tpu.memory_space<vmem>>) attributes {dimension_semantics = [#tpu.dimension_semantics<parallel>], iteration_bounds = array<i64: 1>, scalar_prefetch = 0 : i64, scratch_operands = 0 : i64, tpu.core_type = #tpu.core_type<tc>, window_params = [{transform_indices = @transform_0, window_bounds = array<i64: 4, 73>}, {transform_indices = @transform_1, window_bounds = array<i64: 4, 1024>}, {transform_indices = @transform_2, window_bounds = array<i64: 4, 1024>}, {pipeline_mode = #tpu.pipeline_mode<synchronous>, transform_indices = @transform_3, window_bounds = array<i64: 73, 16>}, {pipeline_mode = #tpu.pipeline_mode<synchronous>, transform_indices = @transform_4, window_bounds = array<i64: 1024, 16>}, {pipeline_mode = #tpu.pipeline_mode<synchronous>, transform_indices = @transform_5, window_bounds = array<i64: 1024, 16>}, {pipeline_mode = #tpu.pipeline_mode<synchronous>, transform_indices = @transform_6, window_bounds = array<i64: 1, 16>}, {pipeline_mode = #tpu.pipeline_mode<synchronous>, transform_indices = @transform_7, window_bounds = array<i64: 16, 8>}, {pipeline_mode = #tpu.pipeline_mode<synchronous>, transform_indices = @transform_8, window_bounds = array<i64: 1, 8>}, {transform_indices = @transform_9, window_bounds = array<i64: 4, 16>}, {transform_indices = @transform_10, window_bounds = array<i64: 4, 8>}]} {
    %c0 = arith.constant 0 : index
    %c0_0 = arith.constant 0 : index
    %0 = vector.load %arg2[%c0, %c0_0] : memref<4x1024xf32, #tpu.memory_space<vmem>>, vector<4x1024xf32>
    %c0_1 = arith.constant 0 : index
    %c0_2 = arith.constant 0 : index
    %1 = vector.load %arg5[%c0_1, %c0_2] : memref<1024x16xf32, #tpu.memory_space<vmem>>, vector<1024x16xf32>
    %cst = arith.constant dense<0.000000e+00> : vector<4x16xf32>
    %2 = tpu.matmul %0, %1, %cst {dimension_numbers = #tpu.dot_dimension_numbers<[1], [0], [0], [1], [0, 0, 1, 1], [], []>} : vector<4x1024xf32>, vector<1024x16xf32>, vector<4x16xf32> -> vector<4x16xf32>
    %c0_3 = arith.constant 0 : index
    %c0_4 = arith.constant 0 : index
    %3 = vector.load %arg3[%c0_3, %c0_4] : memref<4x1024xf32, #tpu.memory_space<vmem>>, vector<4x1024xf32>
    %c0_5 = arith.constant 0 : index
    %c0_6 = arith.constant 0 : index
    %4 = vector.load %arg6[%c0_5, %c0_6] : memref<1024x16xf32, #tpu.memory_space<vmem>>, vector<1024x16xf32>
    %cst_7 = arith.constant dense<0.000000e+00> : vector<4x16xf32>
    %5 = tpu.matmul %3, %4, %cst_7 {dimension_numbers = #tpu.dot_dimension_numbers<[1], [0], [0], [1], [0, 0, 1, 1], [], []>} : vector<4x1024xf32>, vector<1024x16xf32>, vector<4x16xf32> -> vector<4x16xf32>
    %6 = arith.addf %2, %5 : vector<4x16xf32>
    %c0_8 = arith.constant 0 : index
    %c0_9 = arith.constant 0 : index
    %7 = vector.load %arg1[%c0_8, %c0_9] : memref<4x73xf32, #tpu.memory_space<vmem>>, vector<4x73xf32>
    %c0_10 = arith.constant 0 : index
    %c0_11 = arith.constant 0 : index
    %8 = vector.load %arg4[%c0_10, %c0_11] : memref<73x16xf32, #tpu.memory_space<vmem>>, vector<73x16xf32>
    %cst_12 = arith.constant dense<0.000000e+00> : vector<4x16xf32>
    %9 = tpu.matmul %7, %8, %cst_12 {dimension_numbers = #tpu.dot_dimension_numbers<[1], [0], [0], [1], [0, 0, 1, 1], [], []>} : vector<4x73xf32>, vector<73x16xf32>, vector<4x16xf32> -> vector<4x16xf32>
    %10 = arith.addf %6, %9 : vector<4x16xf32>
    %c0_13 = arith.constant 0 : index
    %c0_14 = arith.constant 0 : index
    %11 = vector.load %arg7[%c0_13, %c0_14] : memref<1x16xf32, #tpu.memory_space<vmem>>, vector<1x16xf32>
    %12 = vector.broadcast %11 : vector<1x16xf32> to vector<4x16xf32>
    %13 = arith.addf %10, %12 : vector<4x16xf32>
    %14 = math.tanh %13 : vector<4x16xf32>
    %c0_15 = arith.constant 0 : index
    %c0_16 = arith.constant 0 : index
    %15 = vector.load %arg10[%c0_15, %c0_16] : memref<4x16xf32, #tpu.memory_space<vmem>>, vector<4x16xf32>
    tpu.vector_store %arg10[%c0_15, %c0_16], %14 {strides = array<i32>} : memref<4x16xf32, #tpu.memory_space<vmem>>, vector<4x16xf32>,
    %c0_17 = arith.constant 0 : index
    %c0_18 = arith.constant 0 : index
    %16 = vector.load %arg8[%c0_17, %c0_18] : memref<16x8xf32, #tpu.memory_space<vmem>>, vector<16x8xf32>
    %cst_19 = arith.constant dense<0.000000e+00> : vector<4x8xf32>
    %17 = tpu.matmul %14, %16, %cst_19 {dimension_numbers = #tpu.dot_dimension_numbers<[1], [0], [0], [1], [0, 0, 1, 1], [], []>} : vector<4x16xf32>, vector<16x8xf32>, vector<4x8xf32> -> vector<4x8xf32>
    %c0_20 = arith.constant 0 : index
    %c0_21 = arith.constant 0 : index
    %18 = vector.load %arg9[%c0_20, %c0_21] : memref<1x8xf32, #tpu.memory_space<vmem>>, vector<1x8xf32>
    %19 = vector.broadcast %18 : vector<1x8xf32> to vector<4x8xf32>
    %20 = arith.addf %17, %19 : vector<4x8xf32>
    %cst_22 = arith.constant dense<0xFF800000> : vector<4xf32>
    %21 = vector.multi_reduction <maximumf>, %20, %cst_22 [1] : vector<4x8xf32> to vector<4xf32>
    %22 = vector.shape_cast %21 : vector<4xf32> to vector<4x1xf32>
    %23 = vector.broadcast %22 : vector<4x1xf32> to vector<4x8xf32>
    %24 = arith.subf %20, %23 : vector<4x8xf32>
    %25 = math.exp %24 : vector<4x8xf32>
    %cst_23 = arith.constant dense<0.000000e+00> : vector<4xf32>
    %26 = vector.multi_reduction <add>, %25, %cst_23 [1] : vector<4x8xf32> to vector<4xf32>
    %27 = vector.shape_cast %26 : vector<4xf32> to vector<4x1xf32>
    %28 = vector.broadcast %27 : vector<4x1xf32> to vector<4x8xf32>
    %29 = arith.divf %25, %28 : vector<4x8xf32>
    %c0_24 = arith.constant 0 : index
    %c0_25 = arith.constant 0 : index
    %30 = vector.load %arg11[%c0_24, %c0_25] : memref<4x8xf32, #tpu.memory_space<vmem>>, vector<4x8xf32>
    tpu.vector_store %arg11[%c0_24, %c0_25], %29 {strides = array<i32>} : memref<4x8xf32, #tpu.memory_space<vmem>>, vector<4x8xf32>,
    return
  }
  func.func @transform_0(%arg0: i32) -> (i32, i32) {
    %c0_i32 = arith.constant 0 : i32
    %c0_i32_0 = arith.constant 0 : i32
    return %arg0, %c0_i32 : i32, i32
  }
  func.func @transform_1(%arg0: i32) -> (i32, i32) {
    %c0_i32 = arith.constant 0 : i32
    %c0_i32_0 = arith.constant 0 : i32
    return %arg0, %c0_i32 : i32, i32
  }
  func.func @transform_2(%arg0: i32) -> (i32, i32) {
    %c0_i32 = arith.constant 0 : i32
    %c0_i32_0 = arith.constant 0 : i32
    return %arg0, %c0_i32 : i32, i32
  }
  func.func @transform_3(%arg0: i32) -> (i32, i32) {
    %c0_i32 = arith.constant 0 : i32
    %c0_i32_0 = arith.constant 0 : i32
    %c0_i32_1 = arith.constant 0 : i32
    return %c0_i32, %c0_i32_0 : i32, i32
  }
  func.func @transform_4(%arg0: i32) -> (i32, i32) {
    %c0_i32 = arith.constant 0 : i32
    %c0_i32_0 = arith.constant 0 : i32
    %c0_i32_1 = arith.constant 0 : i32
    return %c0_i32, %c0_i32_0 : i32, i32
  }
  func.func @transform_5(%arg0: i32) -> (i32, i32) {
    %c0_i32 = arith.constant 0 : i32
    %c0_i32_0 = arith.constant 0 : i32
    %c0_i32_1 = arith.constant 0 : i32
    return %c0_i32, %c0_i32_0 : i32, i32
  }
  func.func @transform_6(%arg0: i32) -> (i32, i32) {
    %c0_i32 = arith.constant 0 : i32
    %c0_i32_0 = arith.constant 0 : i32
    %c0_i32_1 = arith.constant 0 : i32
    return %c0_i32, %c0_i32_0 : i32, i32
  }
  func.func @transform_7(%arg0: i32) -> (i32, i32) {
    %c0_i32 = arith.constant 0 : i32
    %c0_i32_0 = arith.constant 0 : i32
    %c0_i32_1 = arith.constant 0 : i32
    return %c0_i32, %c0_i32_0 : i32, i32
  }
  func.func @transform_8(%arg0: i32) -> (i32, i32) {
    %c0_i32 = arith.constant 0 : i32
    %c0_i32_0 = arith.constant 0 : i32
    %c0_i32_1 = arith.constant 0 : i32
    return %c0_i32, %c0_i32_0 : i32, i32
  }
  func.func @transform_9(%arg0: i32) -> (i32, i32) {
    %c0_i32 = arith.constant 0 : i32
    %c0_i32_0 = arith.constant 0 : i32
    return %arg0, %c0_i32 : i32, i32
  }
  func.func @transform_10(%arg0: i32) -> (i32, i32) {
    %c0_i32 = arith.constant 0 : i32
    %c0_i32_0 = arith.constant 0 : i32
    return %arg0, %c0_i32 : i32, i32
  }
}

</mosaic_0001>

<llo_original>
// kernel: tpu_custom_call.1
$region0: #{tpu_custom_call.1}
  #allocation0 [shape = 'u32[]', space=smem, size = 0x4, offset = 0x4, fixed_abs, tag = 'smem constant byte address 0x4 - core index']
  #allocation1 [shape = 'u32[144,128]{1,0:T(1,128)}', space=vmem, size = 0x12000, scoped, tag = 'internal scratch']
  %s0 = inlined_call_operand.vmem [shape: f32[4,73], index: 0, kind: input, shape index: {}]
  %s1 = inlined_call_operand.vmem [shape: f32[4,1024], index: 1, kind: input, shape index: {}]
  %s2 = inlined_call_operand.vmem [shape: f32[4,1024], index: 2, kind: input, shape index: {}]
  %s3 = inlined_call_operand.vmem [shape: f32[73,16], index: 3, kind: input, shape index: {}]
  %s4 = inlined_call_operand.vmem [shape: f32[1024,16], index: 4, kind: input, shape index: {}]
  %s5 = inlined_call_operand.vmem [shape: f32[1024,16], index: 5, kind: input, shape index: {}]
  %s6 = inlined_call_operand.vmem [shape: f32[1,16], index: 6, kind: input, shape index: {}]
  %s7 = inlined_call_operand.vmem [shape: f32[16,8], index: 7, kind: input, shape index: {}]
  %s8 = inlined_call_operand.vmem [shape: f32[1,8], index: 8, kind: input, shape index: {}]
  %s9 = inlined_call_operand.hbm [shape: f32[4,16], index: 9, kind: output, shape index: {0}]
  %s10 = inlined_call_operand.hbm [shape: f32[4,8], index: 10, kind: output, shape index: {1}]
  %11 = xla_tuple %s9, %s10
  %s12 = sld [smem:[#allocation0]]
  $region54: #{tpu_custom_call.1} parent=0
    _
  %s14 = ssub.s32 1, %s12
  %s15 = scalar_select 0, %s14, %s12
  $region1: #{tpu_custom_call.1} parent=0
    #allocation2 [shape = 'u8[2048]{0}', space=vmem, size = 0x800, scoped, tag = 'output window, operand 0, single buffered']
    #allocation3 [shape = 's32[1]{0}', space=sflag, size = 0x4, scoped, tag = 'scoped memory for tpu_custom_call.1']
    #allocation4 [shape = 'u8[2048]{0}', space=vmem, size = 0x800, scoped, tag = 'output window, operand 1, single buffered']
    #allocation5 [shape = 's32[1]{0}', space=sflag, size = 0x4, scoped, tag = 'scoped memory for tpu_custom_call.1']
    %16 = vsyncpa [#allocation3], 0
    %17 = vsyncpa [#allocation5], 0
    // Predicated region
    $region2: #{tpu_custom_call.1} parent=1 // pred_check
      _
    $region3: #{tpu_custom_call.1} parent=1 // pred_check_branch
      %19 = sbr.rel (0) target = $region5
    $region4: #{tpu_custom_call.1} parent=1 // pred_region
      _
    $region5: #{tpu_custom_call.1} parent=1 // pred_fallthru
      _
    // Predicated region
    $region6: #{tpu_custom_call.1} parent=1 // pred_check
      _
    $region7: #{tpu_custom_call.1} parent=1 // pred_check_branch
      %21 = sbr.rel (0) target = $region9
    $region8: #{tpu_custom_call.1} parent=1 // pred_region
      _
    $region9: #{tpu_custom_call.1} parent=1 // pred_fallthru
      _
    // Predicated region
    $region10: #{tpu_custom_call.1} parent=1 // pred_check
      _
    $region11: #{tpu_custom_call.1} parent=1 // pred_check_branch
      %23 = sbr.rel (0) target = $region13
    $region12: #{tpu_custom_call.1} parent=1 // pred_region
      _
    $region13: #{tpu_custom_call.1} parent=1 // pred_fallthru
      _
    // Predicated region
    $region14: #{tpu_custom_call.1} parent=1 // pred_check
      _
    $region15: #{tpu_custom_call.1} parent=1 // pred_check_branch
      %25 = sbr.rel (0) target = $region17
    $region16: #{tpu_custom_call.1} parent=1 // pred_region
      _
    $region17: #{tpu_custom_call.1} parent=1 // pred_fallthru
      _
    // Predicated region
    $region18: #{tpu_custom_call.1} parent=1 // pred_check
      _
    $region19: #{tpu_custom_call.1} parent=1 // pred_check_branch
      %27 = sbr.rel (0) target = $region21
    $region20: #{tpu_custom_call.1} parent=1 // pred_region
      _
    $region21: #{tpu_custom_call.1} parent=1 // pred_fallthru
      _
    // Predicated region
    $region22: #{tpu_custom_call.1} parent=1 // pred_check
      _
    $region23: #{tpu_custom_call.1} parent=1 // pred_check_branch
      %29 = sbr.rel (0) target = $region25
    $region24: #{tpu_custom_call.1} parent=1 // pred_region
      _
    $region25: #{tpu_custom_call.1} parent=1 // pred_fallthru
      _
    // Predicated region
    $region26: #{tpu_custom_call.1} parent=1 // pred_check
      _
    $region27: #{tpu_custom_call.1} parent=1 // pred_check_branch
      %31 = sbr.rel (0) target = $region29
    $region28: #{tpu_custom_call.1} parent=1 // pred_region
      _
    $region29: #{tpu_custom_call.1} parent=1 // pred_fallthru
      _
    // Predicated region
    $region30: #{tpu_custom_call.1} parent=1 // pred_check
      _
    $region31: #{tpu_custom_call.1} parent=1 // pred_check_branch
      %33 = sbr.rel (0) target = $region33
    $region32: #{tpu_custom_call.1} parent=1 // pred_region
      _
    $region33: #{tpu_custom_call.1} parent=1 // pred_fallthru
      _
    // Predicated region
    $region34: #{tpu_custom_call.1} parent=1 // pred_check
      _
    $region35: #{tpu_custom_call.1} parent=1 // pred_check_branch
      %35 = sbr.rel (0) target = $region37
    $region36: #{tpu_custom_call.1} parent=1 // pred_region
      _
    $region37: #{tpu_custom_call.1} parent=1 // pred_fallthru
      _
    %v36 = vld [vmem:[%s1] sm:$0xff]
    %v37 = vld [vmem:[%s1 + $0x8] sm:$0xff]
    %v38 = vld [vmem:[%s1 + $0x10] sm:$0xff]
    %v39 = vld [vmem:[%s1 + $0x18] sm:$0xff]
    %v40 = vld [vmem:[%s4] sm:$0xff]
    %v41 = vld [vmem:[%s4 + $0x8] sm:$0xff]
    %v42 = vld [vmem:[%s4 + $0x10] sm:$0xff]
    %v43 = vld [vmem:[%s4 + $0x18] sm:$0xff]
    %v44 = vld [vmem:[%s4 + $0x20] sm:$0xff]
    %v45 = vld [vmem:[%s4 + $0x28] sm:$0xff]
    %v46 = vld [vmem:[%s4 + $0x30] sm:$0xff]
    %v47 = vld [vmem:[%s4 + $0x38] sm:$0xff]
    %v48 = vld [vmem:[%s4 + $0x40] sm:$0xff]
    %v49 = vld [vmem:[%s4 + $0x48] sm:$0xff]
    %v50 = vld [vmem:[%s4 + $0x50] sm:$0xff]
    %v51 = vld [vmem:[%s4 + $0x58] sm:$0xff]
    %v52 = vld [vmem:[%s4 + $0x60] sm:$0xff]
    %v53 = vld [vmem:[%s4 + $0x68] sm:$0xff]
    %v54 = vld [vmem:[%s4 + $0x70] sm:$0xff]
    %v55 = vld [vmem:[%s4 + $0x78] sm:$0xff]
    %v56 = vld [vmem:[%s4 + $0x80] sm:$0xff]
    %v57 = vld [vmem:[%s4 + $0x88] sm:$0xff]
    %v58 = vld [vmem:[%s4 + $0x90] sm:$0xff]
    %v59 = vld [vmem:[%s4 + $0x98] sm:$0xff]
    %v60 = vld [vmem:[%s4 + $0xa0] sm:$0xff]
    %v61 = vld [vmem:[%s4 + $0xa8] sm:$0xff]
    %v62 = vld [vmem:[%s4 + $0xb0] sm:$0xff]
    %v63 = vld [vmem:[%s4 + $0xb8] sm:$0xff]
    %v64 = vld [vmem:[%s4 + $0xc0] sm:$0xff]
    %v65 = vld [vmem:[%s4 + $0xc8] sm:$0xff]
    %v66 = vld [vmem:[%s4 + $0xd0] sm:$0xff]
    %v67 = vld [vmem:[%s4 + $0xd8] sm:$0xff]
    %v68 = vld [vmem:[%s4 + $0xe0] sm:$0xff]
    %v69 = vld [vmem:[%s4 + $0xe8] sm:$0xff]
    %v70 = vld [vmem:[%s4 + $0xf0] sm:$0xff]
    %v71 = vld [vmem:[%s4 + $0xf8] sm:$0xff]
    %v72 = vld [vmem:[%s4 + $0x100] sm:$0xff]
    %v73 = vld [vmem:[%s4 + $0x108] sm:$0xff]
    %v74 = vld [vmem:[%s4 + $0x110] sm:$0xff]
    %v75 = vld [vmem:[%s4 + $0x118] sm:$0xff]
    %v76 = vld [vmem:[%s4 + $0x120] sm:$0xff]
    %v77 = vld [vmem:[%s4 + $0x128] sm:$0xff]
    %v78 = vld [vmem:[%s4 + $0x130] sm:$0xff]
    %v79 = vld [vmem:[%s4 + $0x138] sm:$0xff]
    %v80 = vld [vmem:[%s4 + $0x140] sm:$0xff]
    %v81 = vld [vmem:[%s4 + $0x148] sm:$0xff]
    %v82 = vld [vmem:[%s4 + $0x150] sm:$0xff]
    %v83 = vld [vmem:[%s4 + $0x158] sm:$0xff]
    %v84 = vld [vmem:[%s4 + $0x160] sm:$0xff]
    %v85 = vld [vmem:[%s4 + $0x168] sm:$0xff]
    %v86 = vld [vmem:[%s4 + $0x170] sm:$0xff]
    %v87 = vld [vmem:[%s4 + $0x178] sm:$0xff]
    %v88 = vld [vmem:[%s4 + $0x180] sm:$0xff]
    %v89 = vld [vmem:[%s4 + $0x188] sm:$0xff]
    %v90 = vld [vmem:[%s4 + $0x190] sm:$0xff]
    %v91 = vld [vmem:[%s4 + $0x198] sm:$0xff]
    %v92 = vld [vmem:[%s4 + $0x1a0] sm:$0xff]
    %v93 = vld [vmem:[%s4 + $0x1a8] sm:$0xff]
    %v94 = vld [vmem:[%s4 + $0x1b0] sm:$0xff]
    %v95 = vld [vmem:[%s4 + $0x1b8] sm:$0xff]
    %v96 = vld [vmem:[%s4 + $0x1c0] sm:$0xff]
    %v97 = vld [vmem:[%s4 + $0x1c8] sm:$0xff]
    %v98 = vld [vmem:[%s4 + $0x1d0] sm:$0xff]
    %v99 = vld [vmem:[%s4 + $0x1d8] sm:$0xff]
    %v100 = vld [vmem:[%s4 + $0x1e0] sm:$0xff]
    %v101 = vld [vmem:[%s4 + $0x1e8] sm:$0xff]
    %v102 = vld [vmem:[%s4 + $0x1f0] sm:$0xff]
    %v103 = vld [vmem:[%s4 + $0x1f8] sm:$0xff]
    %v104 = vld [vmem:[%s4 + $0x200] sm:$0xff]
    %v105 = vld [vmem:[%s4 + $0x208] sm:$0xff]
    %v106 = vld [vmem:[%s4 + $0x210] sm:$0xff]
    %v107 = vld [vmem:[%s4 + $0x218] sm:$0xff]
    %v108 = vld [vmem:[%s4 + $0x220] sm:$0xff]
    %v109 = vld [vmem:[%s4 + $0x228] sm:$0xff]
    %v110 = vld [vmem:[%s4 + $0x230] sm:$0xff]
    %v111 = vld [vmem:[%s4 + $0x238] sm:$0xff]
    %v112 = vld [vmem:[%s4 + $0x240] sm:$0xff]
    %v113 = vld [vmem:[%s4 + $0x248] sm:$0xff]
    %v114 = vld [vmem:[%s4 + $0x250] sm:$0xff]
    %v115 = vld [vmem:[%s4 + $0x258] sm:$0xff]
    %v116 = vld [vmem:[%s4 + $0x260] sm:$0xff]
    %v117 = vld [vmem:[%s4 + $0x268] sm:$0xff]
    %v118 = vld [vmem:[%s4 + $0x270] sm:$0xff]
    %v119 = vld [vmem:[%s4 + $0x278] sm:$0xff]
    %v120 = vld [vmem:[%s4 + $0x280] sm:$0xff]
    %v121 = vld [vmem:[%s4 + $0x288] sm:$0xff]
    %v122 = vld [vmem:[%s4 + $0x290] sm:$0xff]
    %v123 = vld [vmem:[%s4 + $0x298] sm:$0xff]
    %v124 = vld [vmem:[%s4 + $0x2a0] sm:$0xff]
    %v125 = vld [vmem:[%s4 + $0x2a8] sm:$0xff]
    %v126 = vld [vmem:[%s4 + $0x2b0] sm:$0xff]
    %v127 = vld [vmem:[%s4 + $0x2b8] sm:$0xff]
    %v128 = vld [vmem:[%s4 + $0x2c0] sm:$0xff]
    %v129 = vld [vmem:[%s4 + $0x2c8] sm:$0xff]
    %v130 = vld [vmem:[%s4 + $0x2d0] sm:$0xff]
    %v131 = vld [vmem:[%s4 + $0x2d8] sm:$0xff]
    %v132 = vld [vmem:[%s4 + $0x2e0] sm:$0xff]
    %v133 = vld [vmem:[%s4 + $0x2e8] sm:$0xff]
    %v134 = vld [vmem:[%s4 + $0x2f0] sm:$0xff]
    %v135 = vld [vmem:[%s4 + $0x2f8] sm:$0xff]
    %v136 = vld [vmem:[%s4 + $0x300] sm:$0xff]
    %v137 = vld [vmem:[%s4 + $0x308] sm:$0xff]
    %v138 = vld [vmem:[%s4 + $0x310] sm:$0xff]
    %v139 = vld [vmem:[%s4 + $0x318] sm:$0xff]
    %v140 = vld [vmem:[%s4 + $0x320] sm:$0xff]
    %v141 = vld [vmem:[%s4 + $0x328] sm:$0xff]
    %v142 = vld [vmem:[%s4 + $0x330] sm:$0xff]
    %v143 = vld [vmem:[%s4 + $0x338] sm:$0xff]
    %v144 = vld [vmem:[%s4 + $0x340] sm:$0xff]
    %v145 = vld [vmem:[%s4 + $0x348] sm:$0xff]
    %v146 = vld [vmem:[%s4 + $0x350] sm:$0xff]
    %v147 = vld [vmem:[%s4 + $0x358] sm:$0xff]
    %v148 = vld [vmem:[%s4 + $0x360] sm:$0xff]
    %v149 = vld [vmem:[%s4 + $0x368] sm:$0xff]
    %v150 = vld [vmem:[%s4 + $0x370] sm:$0xff]
    %v151 = vld [vmem:[%s4 + $0x378] sm:$0xff]
    %v152 = vld [vmem:[%s4 + $0x380] sm:$0xff]
    %v153 = vld [vmem:[%s4 + $0x388] sm:$0xff]
    %v154 = vld [vmem:[%s4 + $0x390] sm:$0xff]
    %v155 = vld [vmem:[%s4 + $0x398] sm:$0xff]
    %v156 = vld [vmem:[%s4 + $0x3a0] sm:$0xff]
    %v157 = vld [vmem:[%s4 + $0x3a8] sm:$0xff]
    %v158 = vld [vmem:[%s4 + $0x3b0] sm:$0xff]
    %v159 = vld [vmem:[%s4 + $0x3b8] sm:$0xff]
    %v160 = vld [vmem:[%s4 + $0x3c0] sm:$0xff]
    %v161 = vld [vmem:[%s4 + $0x3c8] sm:$0xff]
    %v162 = vld [vmem:[%s4 + $0x3d0] sm:$0xff]
    %v163 = vld [vmem:[%s4 + $0x3d8] sm:$0xff]
    %v164 = vld [vmem:[%s4 + $0x3e0] sm:$0xff]
    %v165 = vld [vmem:[%s4 + $0x3e8] sm:$0xff]
    %v166 = vld [vmem:[%s4 + $0x3f0] sm:$0xff]
    %v167 = vld [vmem:[%s4 + $0x3f8] sm:$0xff]
    %v168 = vld [vmem:[%s2] sm:$0xff]
    %v169 = vld [vmem:[%s2 + $0x8] sm:$0xff]
    %v170 = vld [vmem:[%s2 + $0x10] sm:$0xff]
    %v171 = vld [vmem:[%s2 + $0x18] sm:$0xff]
    %v172 = vld [vmem:[%s5] sm:$0xff]
    %v173 = vld [vmem:[%s5 + $0x8] sm:$0xff]
    %v174 = vld [vmem:[%s5 + $0x10] sm:$0xff]
    %v175 = vld [vmem:[%s5 + $0x18] sm:$0xff]
    %v176 = vld [vmem:[%s5 + $0x20] sm:$0xff]
    %v177 = vld [vmem:[%s5 + $0x28] sm:$0xff]
    %v178 = vld [vmem:[%s5 + $0x30] sm:$0xff]
    %v179 = vld [vmem:[%s5 + $0x38] sm:$0xff]
    %v180 = vld [vmem:[%s5 + $0x40] sm:$0xff]
    %v181 = vld [vmem:[%s5 + $0x48] sm:$0xff]
    %v182 = vld [vmem:[%s5 + $0x50] sm:$0xff]
    %v183 = vld [vmem:[%s5 + $0x58] sm:$0xff]
    %v184 = vld [vmem:[%s5 + $0x60] sm:$0xff]
    %v185 = vld [vmem:[%s5 + $0x68] sm:$0xff]
    %v186 = vld [vmem:[%s5 + $0x70] sm:$0xff]
    %v187 = vld [vmem:[%s5 + $0x78] sm:$0xff]
    %v188 = vld [vmem:[%s5 + $0x80] sm:$0xff]
    %v189 = vld [vmem:[%s5 + $0x88] sm:$0xff]
    %v190 = vld [vmem:[%s5 + $0x90] sm:$0xff]
    %v191 = vld [vmem:[%s5 + $0x98] sm:$0xff]
    %v192 = vld [vmem:[%s5 + $0xa0] sm:$0xff]
    %v193 = vld [vmem:[%s5 + $0xa8] sm:$0xff]
    %v194 = vld [vmem:[%s5 + $0xb0] sm:$0xff]
    %v195 = vld [vmem:[%s5 + $0xb8] sm:$0xff]
    %v196 = vld [vmem:[%s5 + $0xc0] sm:$0xff]
    %v197 = vld [vmem:[%s5 + $0xc8] sm:$0xff]
    %v198 = vld [vmem:[%s5 + $0xd0] sm:$0xff]
    %v199 = vld [vmem:[%s5 + $0xd8] sm:$0xff]
    %v200 = vld [vmem:[%s5 + $0xe0] sm:$0xff]
    %v201 = vld [vmem:[%s5 + $0xe8] sm:$0xff]
    %v202 = vld [vmem:[%s5 + $0xf0] sm:$0xff]
    %v203 = vld [vmem:[%s5 + $0xf8] sm:$0xff]
    %v204 = vld [vmem:[%s5 + $0x100] sm:$0xff]
    %v205 = vld [vmem:[%s5 + $0x108] sm:$0xff]
    %v206 = vld [vmem:[%s5 + $0x110] sm:$0xff]
    %v207 = vld [vmem:[%s5 + $0x118] sm:$0xff]
    %v208 = vld [vmem:[%s5 + $0x120] sm:$0xff]
    %v209 = vld [vmem:[%s5 + $0x128] sm:$0xff]
    %v210 = vld [vmem:[%s5 + $0x130] sm:$0xff]
    %v211 = vld [vmem:[%s5 + $0x138] sm:$0xff]
    %v212 = vld [vmem:[%s5 + $0x140] sm:$0xff]
    %v213 = vld [vmem:[%s5 + $0x148] sm:$0xff]
    %v214 = vld [vmem:[%s5 + $0x150] sm:$0xff]
    %v215 = vld [vmem:[%s5 + $0x158] sm:$0xff]
    %v216 = vld [vmem:[%s5 + $0x160] sm:$0xff]
    %v217 = vld [vmem:[%s5 + $0x168] sm:$0xff]
    %v218 = vld [vmem:[%s5 + $0x170] sm:$0xff]
    %v219 = vld [vmem:[%s5 + $0x178] sm:$0xff]
    %v220 = vld [vmem:[%s5 + $0x180] sm:$0xff]
    %v221 = vld [vmem:[%s5 + $0x188] sm:$0xff]
    %v222 = vld [vmem:[%s5 + $0x190] sm:$0xff]
    %v223 = vld [vmem:[%s5 + $0x198] sm:$0xff]
    %v224 = vld [vmem:[%s5 + $0x1a0] sm:$0xff]
    %v225 = vld [vmem:[%s5 + $0x1a8] sm:$0xff]
    %v226 = vld [vmem:[%s5 + $0x1b0] sm:$0xff]
    %v227 = vld [vmem:[%s5 + $0x1b8] sm:$0xff]
    %v228 = vld [vmem:[%s5 + $0x1c0] sm:$0xff]
    %v229 = vld [vmem:[%s5 + $0x1c8] sm:$0xff]
    %v230 = vld [vmem:[%s5 + $0x1d0] sm:$0xff]
    %v231 = vld [vmem:[%s5 + $0x1d8] sm:$0xff]
    %v232 = vld [vmem:[%s5 + $0x1e0] sm:$0xff]
    %v233 = vld [vmem:[%s5 + $0x1e8] sm:$0xff]
    %v234 = vld [vmem:[%s5 + $0x1f0] sm:$0xff]
    %v235 = vld [vmem:[%s5 + $0x1f8] sm:$0xff]
    %v236 = vld [vmem:[%s5 + $0x200] sm:$0xff]
    %v237 = vld [vmem:[%s5 + $0x208] sm:$0xff]
    %v238 = vld [vmem:[%s5 + $0x210] sm:$0xff]
    %v239 = vld [vmem:[%s5 + $0x218] sm:$0xff]
    %v240 = vld [vmem:[%s5 + $0x220] sm:$0xff]
    %v241 = vld [vmem:[%s5 + $0x228] sm:$0xff]
    %v242 = vld [vmem:[%s5 + $0x230] sm:$0xff]
    %v243 = vld [vmem:[%s5 + $0x238] sm:$0xff]
    %v244 = vld [vmem:[%s5 + $0x240] sm:$0xff]
    %v245 = vld [vmem:[%s5 + $0x248] sm:$0xff]
    %v246 = vld [vmem:[%s5 + $0x250] sm:$0xff]
    %v247 = vld [vmem:[%s5 + $0x258] sm:$0xff]
    %v248 = vld [vmem:[%s5 + $0x260] sm:$0xff]
    %v249 = vld [vmem:[%s5 + $0x268] sm:$0xff]
    %v250 = vld [vmem:[%s5 + $0x270] sm:$0xff]
    %v251 = vld [vmem:[%s5 + $0x278] sm:$0xff]
    %v252 = vld [vmem:[%s5 + $0x280] sm:$0xff]
    %v253 = vld [vmem:[%s5 + $0x288] sm:$0xff]
    %v254 = vld [vmem:[%s5 + $0x290] sm:$0xff]
    %v255 = vld [vmem:[%s5 + $0x298] sm:$0xff]
    %v256 = vld [vmem:[%s5 + $0x2a0] sm:$0xff]
    %v257 = vld [vmem:[%s5 + $0x2a8] sm:$0xff]
    %v258 = vld [vmem:[%s5 + $0x2b0] sm:$0xff]
    %v259 = vld [vmem:[%s5 + $0x2b8] sm:$0xff]
    %v260 = vld [vmem:[%s5 + $0x2c0] sm:$0xff]
    %v261 = vld [vmem:[%s5 + $0x2c8] sm:$0xff]
    %v262 = vld [vmem:[%s5 + $0x2d0] sm:$0xff]
    %v263 = vld [vmem:[%s5 + $0x2d8] sm:$0xff]
    %v264 = vld [vmem:[%s5 + $0x2e0] sm:$0xff]
    %v265 = vld [vmem:[%s5 + $0x2e8] sm:$0xff]
    %v266 = vld [vmem:[%s5 + $0x2f0] sm:$0xff]
    %v267 = vld [vmem:[%s5 + $0x2f8] sm:$0xff]
    %v268 = vld [vmem:[%s5 + $0x300] sm:$0xff]
    %v269 = vld [vmem:[%s5 + $0x308] sm:$0xff]
    %v270 = vld [vmem:[%s5 + $0x310] sm:$0xff]
    %v271 = vld [vmem:[%s5 + $0x318] sm:$0xff]
    %v272 = vld [vmem:[%s5 + $0x320] sm:$0xff]
    %v273 = vld [vmem:[%s5 + $0x328] sm:$0xff]
    %v274 = vld [vmem:[%s5 + $0x330] sm:$0xff]
    %v275 = vld [vmem:[%s5 + $0x338] sm:$0xff]
    %v276 = vld [vmem:[%s5 + $0x340] sm:$0xff]
    %v277 = vld [vmem:[%s5 + $0x348] sm:$0xff]
    %v278 = vld [vmem:[%s5 + $0x350] sm:$0xff]
    %v279 = vld [vmem:[%s5 + $0x358] sm:$0xff]
    %v280 = vld [vmem:[%s5 + $0x360] sm:$0xff]
    %v281 = vld [vmem:[%s5 + $0x368] sm:$0xff]
    %v282 = vld [vmem:[%s5 + $0x370] sm:$0xff]
    %v283 = vld [vmem:[%s5 + $0x378] sm:$0xff]
    %v284 = vld [vmem:[%s5 + $0x380] sm:$0xff]
    %v285 = vld [vmem:[%s5 + $0x388] sm:$0xff]
    %v286 = vld [vmem:[%s5 + $0x390] sm:$0xff]
    %v287 = vld [vmem:[%s5 + $0x398] sm:$0xff]
    %v288 = vld [vmem:[%s5 + $0x3a0] sm:$0xff]
    %v289 = vld [vmem:[%s5 + $0x3a8] sm:$0xff]
    %v290 = vld [vmem:[%s5 + $0x3b0] sm:$0xff]
    %v291 = vld [vmem:[%s5 + $0x3b8] sm:$0xff]
    %v292 = vld [vmem:[%s5 + $0x3c0] sm:$0xff]
    %v293 = vld [vmem:[%s5 + $0x3c8] sm:$0xff]
    %v294 = vld [vmem:[%s5 + $0x3d0] sm:$0xff]
    %v295 = vld [vmem:[%s5 + $0x3d8] sm:$0xff]
    %v296 = vld [vmem:[%s5 + $0x3e0] sm:$0xff]
    %v297 = vld [vmem:[%s5 + $0x3e8] sm:$0xff]
    %v298 = vld [vmem:[%s5 + $0x3f0] sm:$0xff]
    %v299 = vld [vmem:[%s5 + $0x3f8] sm:$0xff]
    %v304 = vcombine.high %v168, %v168
    %v305 = vcombine.high %v169, %v169
    %v306 = vcombine.high %v170, %v170
    %v307 = vcombine.high %v171, %v171
    %312 = vmatprep.subr.mxu0 0.0
    %313 = vmatpush1.msra.mxu0 %v187
    %314 = vmatprep.subr.mxu0 0.0
    %315 = vmatpush1.msra.mxu0 %v186
    %316 = vmatprep.subr.mxu0 0.0
    %317 = vmatpush1.msra.mxu0 %v185
    %318 = vmatprep.subr.mxu0 0.0
    %319 = vmatpush1.msra.mxu0 %v184
    %320 = vmatprep.subr.mxu0 0.0
    %321 = vmatpush1.msra.mxu0 %v183
    %322 = vmatprep.subr.mxu0 0.0
    %323 = vmatpush1.msra.mxu0 %v182
    %324 = vmatprep.subr.mxu0 0.0
    %325 = vmatpush1.msra.mxu0 %v181
    %326 = vmatprep.subr.mxu0 0.0
    %327 = vmatpush1.msra.mxu0 %v180
    %328 = vmatprep.subr.mxu0 0.0
    %329 = vmatpush1.msra.mxu0 %v179
    %330 = vmatprep.subr.mxu0 0.0
    %331 = vmatpush1.msra.mxu0 %v178
    %332 = vmatprep.subr.mxu0 0.0
    %333 = vmatpush1.msra.mxu0 %v177
    %334 = vmatprep.subr.mxu0 0.0
    %335 = vmatpush1.msra.mxu0 %v176
    %336 = vmatprep.subr.mxu0 0.0
    %337 = vmatpush1.msra.mxu0 %v175
    %338 = vmatprep.subr.mxu0 0.0
    %339 = vmatpush1.msra.mxu0 %v174
    %340 = vmatprep.subr.mxu0 0.0
    %341 = vmatpush1.msra.mxu0 %v173
    %342 = vmatprep.subr.mxu0 0.0
    %343 = vmatpush1.msra.mxu0 %v172
    %344 = vmatprep.subr.mxu0 0.0
    %345 = vmatpush2.msra.mxu0 %v203
    %346 = vmatprep.subr.mxu0 0.0
    %347 = vmatpush2.msra.mxu0 %v202
    %348 = vmatprep.subr.mxu0 0.0
    %349 = vmatpush2.msra.mxu0 %v201
    %350 = vmatprep.subr.mxu0 0.0
    %351 = vmatpush2.msra.mxu0 %v200
    %352 = vmatprep.subr.mxu0 0.0
    %353 = vmatpush2.msra.mxu0 %v199
    %354 = vmatprep.subr.mxu0 0.0
    %355 = vmatpush2.msra.mxu0 %v198
    %356 = vmatprep.subr.mxu0 0.0
    %357 = vmatpush2.msra.mxu0 %v197
    %358 = vmatprep.subr.mxu0 0.0
    %359 = vmatpush2.msra.mxu0 %v196
    %360 = vmatprep.subr.mxu0 0.0
    %361 = vmatpush2.msra.mxu0 %v195
    %362 = vmatprep.subr.mxu0 0.0
    %363 = vmatpush2.msra.mxu0 %v194
    %364 = vmatprep.subr.mxu0 0.0
    %365 = vmatpush2.msra.mxu0 %v193
    %366 = vmatprep.subr.mxu0 0.0
    %367 = vmatpush2.msra.mxu0 %v192
    %368 = vmatprep.subr.mxu0 0.0
    %369 = vmatpush2.msra.mxu0 %v191
    %370 = vmatprep.subr.mxu0 0.0
    %371 = vmatpush2.msra.mxu0 %v190
    %372 = vmatprep.subr.mxu0 0.0
    %373 = vmatpush2.msra.mxu0 %v189
    %374 = vmatprep.subr.mxu0 0.0
    %375 = vmatpush2.msra.mxu0 %v188
    %376 = vmatprep.mubr.f32.mxu0 %v304
    %377 = vmatmul.mubr.f32.gmra.mxu0 %v168
    %v378 = vpop.f32.mrf.mxu0
    %v379 = vadd.f32 0.0, %v378
    %v380 = vpop.f32.mrf.mxu0
    %381 = vdwg.mxu0
    %382 = vmatprep.subr.mxu0 0.0
    %383 = vmatpush1.msra.mxu0 %v219
    %384 = vmatprep.subr.mxu0 0.0
    %385 = vmatpush1.msra.mxu0 %v218
    %386 = vmatprep.subr.mxu0 0.0
    %387 = vmatpush1.msra.mxu0 %v217
    %388 = vmatprep.subr.mxu0 0.0
    %389 = vmatpush1.msra.mxu0 %v216
    %390 = vmatprep.subr.mxu0 0.0
    %391 = vmatpush1.msra.mxu0 %v215
    %392 = vmatprep.subr.mxu0 0.0
    %393 = vmatpush1.msra.mxu0 %v214
    %394 = vmatprep.subr.mxu0 0.0
    %395 = vmatpush1.msra.mxu0 %v213
    %396 = vmatprep.subr.mxu0 0.0
    %397 = vmatpush1.msra.mxu0 %v212
    %398 = vmatprep.subr.mxu0 0.0
    %399 = vmatpush1.msra.mxu0 %v211
    %400 = vmatprep.subr.mxu0 0.0
    %401 = vmatpush1.msra.mxu0 %v210
    %402 = vmatprep.subr.mxu0 0.0
    %403 = vmatpush1.msra.mxu0 %v209
    %404 = vmatprep.subr.mxu0 0.0
    %405 = vmatpush1.msra.mxu0 %v208
    %406 = vmatprep.subr.mxu0 0.0
    %407 = vmatpush1.msra.mxu0 %v207
    %408 = vmatprep.subr.mxu0 0.0
    %409 = vmatpush1.msra.mxu0 %v206
    %410 = vmatprep.subr.mxu0 0.0
    %411 = vmatpush1.msra.mxu0 %v205
    %412 = vmatprep.subr.mxu0 0.0
    %413 = vmatpush1.msra.mxu0 %v204
    %414 = vmatprep.subr.mxu0 0.0
    %415 = vmatpush2.msra.mxu0 %v235
    %416 = vmatprep.subr.mxu0 0.0
    %417 = vmatpush2.msra.mxu0 %v234
    %418 = vmatprep.subr.mxu0 0.0
    %419 = vmatpush2.msra.mxu0 %v233
    %420 = vmatprep.subr.mxu0 0.0
    %421 = vmatpush2.msra.mxu0 %v232
    %422 = vmatprep.subr.mxu0 0.0
    %423 = vmatpush2.msra.mxu0 %v231
    %424 = vmatprep.subr.mxu0 0.0
    %425 = vmatpush2.msra.mxu0 %v230
    %426 = vmatprep.subr.mxu0 0.0
    %427 = vmatpush2.msra.mxu0 %v229
    %428 = vmatprep.subr.mxu0 0.0
    %429 = vmatpush2.msra.mxu0 %v228
    %430 = vmatprep.subr.mxu0 0.0
    %431 = vmatpush2.msra.mxu0 %v227
    %432 = vmatprep.subr.mxu0 0.0
    %433 = vmatpush2.msra.mxu0 %v226
    %434 = vmatprep.subr.mxu0 0.0
    %435 = vmatpush2.msra.mxu0 %v225
    %436 = vmatprep.subr.mxu0 0.0
    %437 = vmatpush2.msra.mxu0 %v224
    %438 = vmatprep.subr.mxu0 0.0
    %439 = vmatpush2.msra.mxu0 %v223
    %440 = vmatprep.subr.mxu0 0.0
    %441 = vmatpush2.msra.mxu0 %v222
    %442 = vmatprep.subr.mxu0 0.0
    %443 = vmatpush2.msra.mxu0 %v221
    %444 = vmatprep.subr.mxu0 0.0
    %445 = vmatpush2.msra.mxu0 %v220
    %446 = vmatprep.mubr.f32.mxu0 %v305
    %447 = vmatmul.mubr.f32.gmra.mxu0 %v169
    %v448 = vpop.f32.mrf.mxu0
    %v449 = vadd.f32 %v379, %v448
    %v450 = vpop.f32.mrf.mxu0
    %451 = vdwg.mxu0
    %452 = vmatprep.subr.mxu0 0.0
    %453 = vmatpush1.msra.mxu0 %v251
    %454 = vmatprep.subr.mxu0 0.0
    %455 = vmatpush1.msra.mxu0 %v250
    %456 = vmatprep.subr.mxu0 0.0
    %457 = vmatpush1.msra.mxu0 %v249
    %458 = vmatprep.subr.mxu0 0.0
    %459 = vmatpush1.msra.mxu0 %v248
    %460 = vmatprep.subr.mxu0 0.0
    %461 = vmatpush1.msra.mxu0 %v247
    %462 = vmatprep.subr.mxu0 0.0
    %463 = vmatpush1.msra.mxu0 %v246
    %464 = vmatprep.subr.mxu0 0.0
    %465 = vmatpush1.msra.mxu0 %v245
    %466 = vmatprep.subr.mxu0 0.0
    %467 = vmatpush1.msra.mxu0 %v244
    %468 = vmatprep.subr.mxu0 0.0
    %469 = vmatpush1.msra.mxu0 %v243
    %470 = vmatprep.subr.mxu0 0.0
    %471 = vmatpush1.msra.mxu0 %v242
    %472 = vmatprep.subr.mxu0 0.0
    %473 = vmatpush1.msra.mxu0 %v241
    %474 = vmatprep.subr.mxu0 0.0
    %475 = vmatpush1.msra.mxu0 %v240
    %476 = vmatprep.subr.mxu0 0.0
    %477 = vmatpush1.msra.mxu0 %v239
    %478 = vmatprep.subr.mxu0 0.0
    %479 = vmatpush1.msra.mxu0 %v238
    %480 = vmatprep.subr.mxu0 0.0
    %481 = vmatpush1.msra.mxu0 %v237
    %482 = vmatprep.subr.mxu0 0.0
    %483 = vmatpush1.msra.mxu0 %v236
    %484 = vmatprep.subr.mxu0 0.0
    %485 = vmatpush2.msra.mxu0 %v267
    %486 = vmatprep.subr.mxu0 0.0
    %487 = vmatpush2.msra.mxu0 %v266
    %488 = vmatprep.subr.mxu0 0.0
    %489 = vmatpush2.msra.mxu0 %v265
    %490 = vmatprep.subr.mxu0 0.0
    %491 = vmatpush2.msra.mxu0 %v264
    %492 = vmatprep.subr.mxu0 0.0
    %493 = vmatpush2.msra.mxu0 %v263
    %494 = vmatprep.subr.mxu0 0.0
    %495 = vmatpush2.msra.mxu0 %v262
    %496 = vmatprep.subr.mxu0 0.0
    %497 = vmatpush2.msra.mxu0 %v261
    %498 = vmatprep.subr.mxu0 0.0
    %499 = vmatpush2.msra.mxu0 %v260
    %500 = vmatprep.subr.mxu0 0.0
    %501 = vmatpush2.msra.mxu0 %v259
    %502 = vmatprep.subr.mxu0 0.0
    %503 = vmatpush2.msra.mxu0 %v258
    %504 = vmatprep.subr.mxu0 0.0
    %505 = vmatpush2.msra.mxu0 %v257
    %506 = vmatprep.subr.mxu0 0.0
    %507 = vmatpush2.msra.mxu0 %v256
    %508 = vmatprep.subr.mxu0 0.0
    %509 = vmatpush2.msra.mxu0 %v255
    %510 = vmatprep.subr.mxu0 0.0
    %511 = vmatpush2.msra.mxu0 %v254
    %512 = vmatprep.subr.mxu0 0.0
    %513 = vmatpush2.msra.mxu0 %v253
    %514 = vmatprep.subr.mxu0 0.0
    %515 = vmatpush2.msra.mxu0 %v252
    %516 = vmatprep.mubr.f32.mxu0 %v306
    %517 = vmatmul.mubr.f32.gmra.mxu0 %v170
    %v518 = vpop.f32.mrf.mxu0
    %v519 = vadd.f32 %v449, %v518
    %v520 = vpop.f32.mrf.mxu0
    %521 = vdwg.mxu0
    %522 = vmatprep.subr.mxu0 0.0
    %523 = vmatpush1.msra.mxu0 %v283
    %524 = vmatprep.subr.mxu0 0.0
    %525 = vmatpush1.msra.mxu0 %v282
    %526 = vmatprep.subr.mxu0 0.0
    %527 = vmatpush1.msra.mxu0 %v281
    %528 = vmatprep.subr.mxu0 0.0
    %529 = vmatpush1.msra.mxu0 %v280
    %530 = vmatprep.subr.mxu0 0.0
    %531 = vmatpush1.msra.mxu0 %v279
    %532 = vmatprep.subr.mxu0 0.0
    %533 = vmatpush1.msra.mxu0 %v278
    %534 = vmatprep.subr.mxu0 0.0
    %535 = vmatpush1.msra.mxu0 %v277
    %536 = vmatprep.subr.mxu0 0.0
    %537 = vmatpush1.msra.mxu0 %v276
    %538 = vmatprep.subr.mxu0 0.0
    %539 = vmatpush1.msra.mxu0 %v275
    %540 = vmatprep.subr.mxu0 0.0
    %541 = vmatpush1.msra.mxu0 %v274
    %542 = vmatprep.subr.mxu0 0.0
    %543 = vmatpush1.msra.mxu0 %v273
    %544 = vmatprep.subr.mxu0 0.0
    %545 = vmatpush1.msra.mxu0 %v272
    %546 = vmatprep.subr.mxu0 0.0
    %547 = vmatpush1.msra.mxu0 %v271
    %548 = vmatprep.subr.mxu0 0.0
    %549 = vmatpush1.msra.mxu0 %v270
    %550 = vmatprep.subr.mxu0 0.0
    %551 = vmatpush1.msra.mxu0 %v269
    %552 = vmatprep.subr.mxu0 0.0
    %553 = vmatpush1.msra.mxu0 %v268
    %554 = vmatprep.subr.mxu0 0.0
    %555 = vmatpush2.msra.mxu0 %v299
    %556 = vmatprep.subr.mxu0 0.0
    %557 = vmatpush2.msra.mxu0 %v298
    %558 = vmatprep.subr.mxu0 0.0
    %559 = vmatpush2.msra.mxu0 %v297
    %560 = vmatprep.subr.mxu0 0.0
    %561 = vmatpush2.msra.mxu0 %v296
    %562 = vmatprep.subr.mxu0 0.0
    %563 = vmatpush2.msra.mxu0 %v295
    %564 = vmatprep.subr.mxu0 0.0
    %565 = vmatpush2.msra.mxu0 %v294
    %566 = vmatprep.subr.mxu0 0.0
    %567 = vmatpush2.msra.mxu0 %v293
    %568 = vmatprep.subr.mxu0 0.0
    %569 = vmatpush2.msra.mxu0 %v292
    %570 = vmatprep.subr.mxu0 0.0
    %571 = vmatpush2.msra.mxu0 %v291
    %572 = vmatprep.subr.mxu0 0.0
    %573 = vmatpush2.msra.mxu0 %v290
    %574 = vmatprep.subr.mxu0 0.0
    %575 = vmatpush2.msra.mxu0 %v289
    %576 = vmatprep.subr.mxu0 0.0
    %577 = vmatpush2.msra.mxu0 %v288
    %578 = vmatprep.subr.mxu0 0.0
    %579 = vmatpush2.msra.mxu0 %v287
    %580 = vmatprep.subr.mxu0 0.0
    %581 = vmatpush2.msra.mxu0 %v286
    %582 = vmatprep.subr.mxu0 0.0
    %583 = vmatpush2.msra.mxu0 %v285
    %584 = vmatprep.subr.mxu0 0.0
    %585 = vmatpush2.msra.mxu0 %v284
    %586 = vmatprep.mubr.f32.mxu0 %v307
    %587 = vmatmul.mubr.f32.gmra.mxu0 %v171
    %v588 = vpop.f32.mrf.mxu0
    %v589 = vadd.f32 %v519, %v588
    %v590 = vpop.f32.mrf.mxu0
    %591 = vdwg.mxu0
    %v596 = vcombine.high %v36, %v36
    %v597 = vcombine.high %v37, %v37
    %v598 = vcombine.high %v38, %v38
    %v599 = vcombine.high %v39, %v39
    %604 = vmatprep.subr.mxu0 0.0
    %605 = vmatpush1.msra.mxu0 %v55
    %606 = vmatprep.subr.mxu0 0.0
    %607 = vmatpush1.msra.mxu0 %v54
    %608 = vmatprep.subr.mxu0 0.0
    %609 = vmatpush1.msra.mxu0 %v53
    %610 = vmatprep.subr.mxu0 0.0
    %611 = vmatpush1.msra.mxu0 %v52
    %612 = vmatprep.subr.mxu0 0.0
    %613 = vmatpush1.msra.mxu0 %v51
    %614 = vmatprep.subr.mxu0 0.0
    %615 = vmatpush1.msra.mxu0 %v50
    %616 = vmatprep.subr.mxu0 0.0
    %617 = vmatpush1.msra.mxu0 %v49
    %618 = vmatprep.subr.mxu0 0.0
    %619 = vmatpush1.msra.mxu0 %v48
    %620 = vmatprep.subr.mxu0 0.0
    %621 = vmatpush1.msra.mxu0 %v47
    %622 = vmatprep.subr.mxu0 0.0
    %623 = vmatpush1.msra.mxu0 %v46
    %624 = vmatprep.subr.mxu0 0.0
    %625 = vmatpush1.msra.mxu0 %v45
    %626 = vmatprep.subr.mxu0 0.0
    %627 = vmatpush1.msra.mxu0 %v44
    %628 = vmatprep.subr.mxu0 0.0
    %629 = vmatpush1.msra.mxu0 %v43
    %630 = vmatprep.subr.mxu0 0.0
    %631 = vmatpush1.msra.mxu0 %v42
    %632 = vmatprep.subr.mxu0 0.0
    %633 = vmatpush1.msra.mxu0 %v41
    %634 = vmatprep.subr.mxu0 0.0
    %635 = vmatpush1.msra.mxu0 %v40
    %636 = vmatprep.subr.mxu0 0.0
    %637 = vmatpush2.msra.mxu0 %v71
    %638 = vmatprep.subr.mxu0 0.0
    %639 = vmatpush2.msra.mxu0 %v70
    %640 = vmatprep.subr.mxu0 0.0
    %641 = vmatpush2.msra.mxu0 %v69
    %642 = vmatprep.subr.mxu0 0.0
    %643 = vmatpush2.msra.mxu0 %v68
    %644 = vmatprep.subr.mxu0 0.0
    %645 = vmatpush2.msra.mxu0 %v67
    %646 = vmatprep.subr.mxu0 0.0
    %647 = vmatpush2.msra.mxu0 %v66
    %648 = vmatprep.subr.mxu0 0.0
    %649 = vmatpush2.msra.mxu0 %v65
    %650 = vmatprep.subr.mxu0 0.0
    %651 = vmatpush2.msra.mxu0 %v64
    %652 = vmatprep.subr.mxu0 0.0
    %653 = vmatpush2.msra.mxu0 %v63
    %654 = vmatprep.subr.mxu0 0.0
    %655 = vmatpush2.msra.mxu0 %v62
    %656 = vmatprep.subr.mxu0 0.0
    %657 = vmatpush2.msra.mxu0 %v61
    %658 = vmatprep.subr.mxu0 0.0
    %659 = vmatpush2.msra.mxu0 %v60
    %660 = vmatprep.subr.mxu0 0.0
    %661 = vmatpush2.msra.mxu0 %v59
    %662 = vmatprep.subr.mxu0 0.0
    %663 = vmatpush2.msra.mxu0 %v58
    %664 = vmatprep.subr.mxu0 0.0
    %665 = vmatpush2.msra.mxu0 %v57
    %666 = vmatprep.subr.mxu0 0.0
    %667 = vmatpush2.msra.mxu0 %v56
    %668 = vmatprep.mubr.f32.mxu0 %v596
    %669 = vmatmul.mubr.f32.gmra.mxu0 %v36
    %v670 = vpop.f32.mrf.mxu0
    %v671 = vadd.f32 %v589, %v670
    %v672 = vpop.f32.mrf.mxu0
    %673 = vdwg.mxu0
    %674 = vmatprep.subr.mxu0 0.0
    %675 = vmatpush1.msra.mxu0 %v87
    %676 = vmatprep.subr.mxu0 0.0
    %677 = vmatpush1.msra.mxu0 %v86
    %678 = vmatprep.subr.mxu0 0.0
    %679 = vmatpush1.msra.mxu0 %v85
    %680 = vmatprep.subr.mxu0 0.0
    %681 = vmatpush1.msra.mxu0 %v84
    %682 = vmatprep.subr.mxu0 0.0
    %683 = vmatpush1.msra.mxu0 %v83
    %684 = vmatprep.subr.mxu0 0.0
    %685 = vmatpush1.msra.mxu0 %v82
    %686 = vmatprep.subr.mxu0 0.0
    %687 = vmatpush1.msra.mxu0 %v81
    %688 = vmatprep.subr.mxu0 0.0
    %689 = vmatpush1.msra.mxu0 %v80
    %690 = vmatprep.subr.mxu0 0.0
    %691 = vmatpush1.msra.mxu0 %v79
    %692 = vmatprep.subr.mxu0 0.0
    %693 = vmatpush1.msra.mxu0 %v78
    %694 = vmatprep.subr.mxu0 0.0
    %695 = vmatpush1.msra.mxu0 %v77
    %696 = vmatprep.subr.mxu0 0.0
    %697 = vmatpush1.msra.mxu0 %v76
    %698 = vmatprep.subr.mxu0 0.0
    %699 = vmatpush1.msra.mxu0 %v75
    %700 = vmatprep.subr.mxu0 0.0
    %701 = vmatpush1.msra.mxu0 %v74
    %702 = vmatprep.subr.mxu0 0.0
    %703 = vmatpush1.msra.mxu0 %v73
    %704 = vmatprep.subr.mxu0 0.0
    %705 = vmatpush1.msra.mxu0 %v72
    %706 = vmatprep.subr.mxu0 0.0
    %707 = vmatpush2.msra.mxu0 %v103
    %708 = vmatprep.subr.mxu0 0.0
    %709 = vmatpush2.msra.mxu0 %v102
    %710 = vmatprep.subr.mxu0 0.0
    %711 = vmatpush2.msra.mxu0 %v101
    %712 = vmatprep.subr.mxu0 0.0
    %713 = vmatpush2.msra.mxu0 %v100
    %714 = vmatprep.subr.mxu0 0.0
    %715 = vmatpush2.msra.mxu0 %v99
    %716 = vmatprep.subr.mxu0 0.0
    %717 = vmatpush2.msra.mxu0 %v98
    %718 = vmatprep.subr.mxu0 0.0
    %719 = vmatpush2.msra.mxu0 %v97
    %720 = vmatprep.subr.mxu0 0.0
    %721 = vmatpush2.msra.mxu0 %v96
    %722 = vmatprep.subr.mxu0 0.0
    %723 = vmatpush2.msra.mxu0 %v95
    %724 = vmatprep.subr.mxu0 0.0
    %725 = vmatpush2.msra.mxu0 %v94
    %726 = vmatprep.subr.mxu0 0.0
    %727 = vmatpush2.msra.mxu0 %v93
    %728 = vmatprep.subr.mxu0 0.0
    %729 = vmatpush2.msra.mxu0 %v92
    %730 = vmatprep.subr.mxu0 0.0
    %731 = vmatpush2.msra.mxu0 %v91
    %732 = vmatprep.subr.mxu0 0.0
    %733 = vmatpush2.msra.mxu0 %v90
    %734 = vmatprep.subr.mxu0 0.0
    %735 = vmatpush2.msra.mxu0 %v89
    %736 = vmatprep.subr.mxu0 0.0
    %737 = vmatpush2.msra.mxu0 %v88
    %738 = vmatprep.mubr.f32.mxu0 %v597
    %739 = vmatmul.mubr.f32.gmra.mxu0 %v37
    %v740 = vpop.f32.mrf.mxu0
    %v741 = vadd.f32 %v671, %v740
    %v742 = vpop.f32.mrf.mxu0
    %743 = vdwg.mxu0
    %744 = vmatprep.subr.mxu0 0.0
    %745 = vmatpush1.msra.mxu0 %v119
    %746 = vmatprep.subr.mxu0 0.0
    %747 = vmatpush1.msra.mxu0 %v118
    %748 = vmatprep.subr.mxu0 0.0
    %749 = vmatpush1.msra.mxu0 %v117
    %750 = vmatprep.subr.mxu0 0.0
    %751 = vmatpush1.msra.mxu0 %v116
    %752 = vmatprep.subr.mxu0 0.0
    %753 = vmatpush1.msra.mxu0 %v115
    %754 = vmatprep.subr.mxu0 0.0
    %755 = vmatpush1.msra.mxu0 %v114
    %756 = vmatprep.subr.mxu0 0.0
    %757 = vmatpush1.msra.mxu0 %v113
    %758 = vmatprep.subr.mxu0 0.0
    %759 = vmatpush1.msra.mxu0 %v112
    %760 = vmatprep.subr.mxu0 0.0
    %761 = vmatpush1.msra.mxu0 %v111
    %762 = vmatprep.subr.mxu0 0.0
    %763 = vmatpush1.msra.mxu0 %v110
    %764 = vmatprep.subr.mxu0 0.0
    %765 = vmatpush1.msra.mxu0 %v109
    %766 = vmatprep.subr.mxu0 0.0
    %767 = vmatpush1.msra.mxu0 %v108
    %768 = vmatprep.subr.mxu0 0.0
    %769 = vmatpush1.msra.mxu0 %v107
    %770 = vmatprep.subr.mxu0 0.0
    %771 = vmatpush1.msra.mxu0 %v106
    %772 = vmatprep.subr.mxu0 0.0
    %773 = vmatpush1.msra.mxu0 %v105
    %774 = vmatprep.subr.mxu0 0.0
    %775 = vmatpush1.msra.mxu0 %v104
    %776 = vmatprep.subr.mxu0 0.0
    %777 = vmatpush2.msra.mxu0 %v135
    %778 = vmatprep.subr.mxu0 0.0
    %779 = vmatpush2.msra.mxu0 %v134
    %780 = vmatprep.subr.mxu0 0.0
    %781 = vmatpush2.msra.mxu0 %v133
    %782 = vmatprep.subr.mxu0 0.0
    %783 = vmatpush2.msra.mxu0 %v132
    %784 = vmatprep.subr.mxu0 0.0
    %785 = vmatpush2.msra.mxu0 %v131
    %786 = vmatprep.subr.mxu0 0.0
    %787 = vmatpush2.msra.mxu0 %v130
    %788 = vmatprep.subr.mxu0 0.0
    %789 = vmatpush2.msra.mxu0 %v129
    %790 = vmatprep.subr.mxu0 0.0
    %791 = vmatpush2.msra.mxu0 %v128
    %792 = vmatprep.subr.mxu0 0.0
    %793 = vmatpush2.msra.mxu0 %v127
    %794 = vmatprep.subr.mxu0 0.0
    %795 = vmatpush2.msra.mxu0 %v126
    %796 = vmatprep.subr.mxu0 0.0
    %797 = vmatpush2.msra.mxu0 %v125
    %798 = vmatprep.subr.mxu0 0.0
    %799 = vmatpush2.msra.mxu0 %v124
    %800 = vmatprep.subr.mxu0 0.0
    %801 = vmatpush2.msra.mxu0 %v123
    %802 = vmatprep.subr.mxu0 0.0
    %803 = vmatpush2.msra.mxu0 %v122
    %804 = vmatprep.subr.mxu0 0.0
    %805 = vmatpush2.msra.mxu0 %v121
    %806 = vmatprep.subr.mxu0 0.0
    %807 = vmatpush2.msra.mxu0 %v120
    %808 = vmatprep.mubr.f32.mxu0 %v598
    %809 = vmatmul.mubr.f32.gmra.mxu0 %v38
    %v810 = vpop.f32.mrf.mxu0
    %v811 = vadd.f32 %v741, %v810
    %v812 = vpop.f32.mrf.mxu0
    %813 = vdwg.mxu0
    %814 = vmatprep.subr.mxu0 0.0
    %815 = vmatpush1.msra.mxu0 %v151
    %816 = vmatprep.subr.mxu0 0.0
    %817 = vmatpush1.msra.mxu0 %v150
    %818 = vmatprep.subr.mxu0 0.0
    %819 = vmatpush1.msra.mxu0 %v149
    %820 = vmatprep.subr.mxu0 0.0
    %821 = vmatpush1.msra.mxu0 %v148
    %822 = vmatprep.subr.mxu0 0.0
    %823 = vmatpush1.msra.mxu0 %v147
    %824 = vmatprep.subr.mxu0 0.0
    %825 = vmatpush1.msra.mxu0 %v146
    %826 = vmatprep.subr.mxu0 0.0
    %827 = vmatpush1.msra.mxu0 %v145
    %828 = vmatprep.subr.mxu0 0.0
    %829 = vmatpush1.msra.mxu0 %v144
    %830 = vmatprep.subr.mxu0 0.0
    %831 = vmatpush1.msra.mxu0 %v143
    %832 = vmatprep.subr.mxu0 0.0
    %833 = vmatpush1.msra.mxu0 %v142
    %834 = vmatprep.subr.mxu0 0.0
    %835 = vmatpush1.msra.mxu0 %v141
    %836 = vmatprep.subr.mxu0 0.0
    %837 = vmatpush1.msra.mxu0 %v140
    %838 = vmatprep.subr.mxu0 0.0
    %839 = vmatpush1.msra.mxu0 %v139
    %840 = vmatprep.subr.mxu0 0.0
    %841 = vmatpush1.msra.mxu0 %v138
    %842 = vmatprep.subr.mxu0 0.0
    %843 = vmatpush1.msra.mxu0 %v137
    %844 = vmatprep.subr.mxu0 0.0
    %845 = vmatpush1.msra.mxu0 %v136
    %846 = vmatprep.subr.mxu0 0.0
    %847 = vmatpush2.msra.mxu0 %v167
    %848 = vmatprep.subr.mxu0 0.0
    %849 = vmatpush2.msra.mxu0 %v166
    %850 = vmatprep.subr.mxu0 0.0
    %851 = vmatpush2.msra.mxu0 %v165
    %852 = vmatprep.subr.mxu0 0.0
    %853 = vmatpush2.msra.mxu0 %v164
    %854 = vmatprep.subr.mxu0 0.0
    %855 = vmatpush2.msra.mxu0 %v163
    %856 = vmatprep.subr.mxu0 0.0
    %857 = vmatpush2.msra.mxu0 %v162
    %858 = vmatprep.subr.mxu0 0.0
    %859 = vmatpush2.msra.mxu0 %v161
    %860 = vmatprep.subr.mxu0 0.0
    %861 = vmatpush2.msra.mxu0 %v160
    %862 = vmatprep.subr.mxu0 0.0
    %863 = vmatpush2.msra.mxu0 %v159
    %864 = vmatprep.subr.mxu0 0.0
    %865 = vmatpush2.msra.mxu0 %v158
    %866 = vmatprep.subr.mxu0 0.0
    %867 = vmatpush2.msra.mxu0 %v157
    %868 = vmatprep.subr.mxu0 0.0
    %869 = vmatpush2.msra.mxu0 %v156
    %870 = vmatprep.subr.mxu0 0.0
    %871 = vmatpush2.msra.mxu0 %v155
    %872 = vmatprep.subr.mxu0 0.0
    %873 = vmatpush2.msra.mxu0 %v154
    %874 = vmatprep.subr.mxu0 0.0
    %875 = vmatpush2.msra.mxu0 %v153
    %876 = vmatprep.subr.mxu0 0.0
    %877 = vmatpush2.msra.mxu0 %v152
    %878 = vmatprep.mubr.f32.mxu0 %v599
    %879 = vmatmul.mubr.f32.gmra.mxu0 %v39
    %v880 = vpop.f32.mrf.mxu0
    %v881 = vadd.f32 %v811, %v880
    %v882 = vpop.f32.mrf.mxu0
    %883 = vdwg.mxu0
    %v884 = vld [vmem:[%s0] sm:$0xf]
    %v885 = vld [vmem:[%s3] sm:$0xff]
    %v886 = vld [vmem:[%s3 + $0x8] sm:$0xff]
    %v887 = vld [vmem:[%s3 + $0x10] sm:$0xff]
    %v888 = vld [vmem:[%s3 + $0x18] sm:$0xff]
    %v889 = vld [vmem:[%s3 + $0x20] sm:$0xff]
    %v890 = vld [vmem:[%s3 + $0x28] sm:$0xff]
    %v891 = vld [vmem:[%s3 + $0x30] sm:$0xff]
    %v892 = vld [vmem:[%s3 + $0x38] sm:$0xff]
    %v893 = vld [vmem:[%s3 + $0x40] sm:$0xff]
    %v894 = vld [vmem:[%s3 + $0x48] sm:$0x1]
    %vm895 = vcmask 596992
    %v897 = vsel %vm895, %v884, 0
    %vm899 = vcmask 1040384
    %v901 = vsel %vm899, %v894, 0
    %903 = vmatprep.subr.mxu0 0.0
    %904 = vmatpush1.msra.mxu0 0.0
    %905 = vmatprep.subr.mxu0 0.0
    %906 = vmatpush1.msra.mxu0 0.0
    %907 = vmatprep.subr.mxu0 0.0
    %908 = vmatpush1.msra.mxu0 0.0
    %909 = vmatprep.subr.mxu0 0.0
    %910 = vmatpush1.msra.mxu0 0.0
    %911 = vmatprep.subr.mxu0 0.0
    %912 = vmatpush1.msra.mxu0 0.0
    %913 = vmatprep.subr.mxu0 0.0
    %914 = vmatpush1.msra.mxu0 0.0
    %915 = vmatprep.subr.mxu0 0.0
    %916 = vmatpush1.msra.mxu0 %v901
    %917 = vmatprep.subr.mxu0 0.0
    %918 = vmatpush1.msra.mxu0 %v893
    %919 = vmatprep.subr.mxu0 0.0
    %920 = vmatpush1.msra.mxu0 %v892
    %921 = vmatprep.subr.mxu0 0.0
    %922 = vmatpush1.msra.mxu0 %v891
    %923 = vmatprep.subr.mxu0 0.0
    %924 = vmatpush1.msra.mxu0 %v890
    %925 = vmatprep.subr.mxu0 0.0
    %926 = vmatpush1.msra.mxu0 %v889
    %927 = vmatprep.subr.mxu0 0.0
    %928 = vmatpush1.msra.mxu0 %v888
    %929 = vmatprep.subr.mxu0 0.0
    %930 = vmatpush1.msra.mxu0 %v887
    %931 = vmatprep.subr.mxu0 0.0
    %932 = vmatpush1.msra.mxu0 %v886
    %933 = vmatprep.subr.mxu0 0.0
    %934 = vmatpush1.msra.mxu0 %v885
    %935 = vmatprep.subr.mxu0 0.0
    %936 = vmatpush2.msra.mxu0 0.0
    %937 = vmatprep.subr.mxu0 0.0
    %938 = vmatpush2.msra.mxu0 0.0
    %939 = vmatprep.subr.mxu0 0.0
    %940 = vmatpush2.msra.mxu0 0.0
    %941 = vmatprep.subr.mxu0 0.0
    %942 = vmatpush2.msra.mxu0 0.0
    %943 = vmatprep.subr.mxu0 0.0
    %944 = vmatpush2.msra.mxu0 0.0
    %945 = vmatprep.subr.mxu0 0.0
    %946 = vmatpush2.msra.mxu0 0.0
    %947 = vmatprep.subr.mxu0 0.0
    %948 = vmatpush2.msra.mxu0 0.0
    %949 = vmatprep.subr.mxu0 0.0
    %950 = vmatpush2.msra.mxu0 0.0
    %951 = vmatprep.subr.mxu0 0.0
    %952 = vmatpush2.msra.mxu0 0.0
    %953 = vmatprep.subr.mxu0 0.0
    %954 = vmatpush2.msra.mxu0 0.0
    %955 = vmatprep.subr.mxu0 0.0
    %956 = vmatpush2.msra.mxu0 0.0
    %957 = vmatprep.subr.mxu0 0.0
    %958 = vmatpush2.msra.mxu0 0.0
    %959 = vmatprep.subr.mxu0 0.0
    %960 = vmatpush2.msra.mxu0 0.0
    %961 = vmatprep.subr.mxu0 0.0
    %962 = vmatpush2.msra.mxu0 0.0
    %963 = vmatprep.subr.mxu0 0.0
    %964 = vmatpush2.msra.mxu0 0.0
    %965 = vmatprep.subr.mxu0 0.0
    %966 = vmatpush2.msra.mxu0 0.0
    %967 = vmatprep.mubr.f32.mxu0 0.0
    %968 = vmatmul.mubr.f32.gmra.mxu0 %v897
    %v969 = vpop.f32.mrf.mxu0
    %v970 = vadd.f32 0.0, %v969
    %v971 = vpop.f32.mrf.mxu0
    %972 = vdwg.mxu0
    %v973 = vadd.f32 %v881, %v970
    %v974 = vld [vmem:[%s6] sm:$0x1]
    %v976 = vlaneseq
    %v977 = vshrl.u32 %v976, 7
    %v978 = vsub.s32 0, %v977
    %v979 = vrot.slane %v974, %v978
    %v981 = vadd.f32 %v973, %v979
    %v982 = vtanh.pop %v981
    %vm983 = vcmask 125952
    %984 = vst.msk [vmem:[#allocation2] sm:$0xf] %vm983, %v982
    %v985 = vld [vmem:[%s7] sm:$0xff]
    %v986 = vld [vmem:[%s7 + $0x8] sm:$0xff]
    %v987 = vld [vmem:[%s8] sm:$0x1]
    %v989 = vlaneseq
    %v990 = vshrl.u32 %v989, 7
    %v991 = vsub.s32 0, %v990
    %v992 = vrot.slane %v987, %v991
    %vm994 = vcmask 130048
    %v996 = vsel %vm994, %v982, 0
    %998 = vmatprep.subr.mxu0 0.0
    %999 = vmatpush1.msra.mxu0 0.0
    %1000 = vmatprep.subr.mxu0 0.0
    %1001 = vmatpush1.msra.mxu0 0.0
    %1002 = vmatprep.subr.mxu0 0.0
    %1003 = vmatpush1.msra.mxu0 0.0
    %1004 = vmatprep.subr.mxu0 0.0
    %1005 = vmatpush1.msra.mxu0 0.0
    %1006 = vmatprep.subr.mxu0 0.0
    %1007 = vmatpush1.msra.mxu0 0.0
    %1008 = vmatprep.subr.mxu0 0.0
    %1009 = vmatpush1.msra.mxu0 0.0
    %1010 = vmatprep.subr.mxu0 0.0
    %1011 = vmatpush1.msra.mxu0 0.0
    %1012 = vmatprep.subr.mxu0 0.0
    %1013 = vmatpush1.msra.mxu0 0.0
    %1014 = vmatprep.subr.mxu0 0.0
    %1015 = vmatpush1.msra.mxu0 0.0
    %1016 = vmatprep.subr.mxu0 0.0
    %1017 = vmatpush1.msra.mxu0 0.0
    %1018 = vmatprep.subr.mxu0 0.0
    %1019 = vmatpush1.msra.mxu0 0.0
    %1020 = vmatprep.subr.mxu0 0.0
    %1021 = vmatpush1.msra.mxu0 0.0
    %1022 = vmatprep.subr.mxu0 0.0
    %1023 = vmatpush1.msra.mxu0 0.0
    %1024 = vmatprep.subr.mxu0 0.0
    %1025 = vmatpush1.msra.mxu0 0.0
    %1026 = vmatprep.subr.mxu0 0.0
    %1027 = vmatpush1.msra.mxu0 %v986
    %1028 = vmatprep.subr.mxu0 0.0
    %1029 = vmatpush1.msra.mxu0 %v985
    %1030 = vmatprep.subr.mxu0 0.0
    %1031 = vmatpush2.msra.mxu0 0.0
    %1032 = vmatprep.subr.mxu0 0.0
    %1033 = vmatpush2.msra.mxu0 0.0
    %1034 = vmatprep.subr.mxu0 0.0
    %1035 = vmatpush2.msra.mxu0 0.0
    %1036 = vmatprep.subr.mxu0 0.0
    %1037 = vmatpush2.msra.mxu0 0.0
    %1038 = vmatprep.subr.mxu0 0.0
    %1039 = vmatpush2.msra.mxu0 0.0
    %1040 = vmatprep.subr.mxu0 0.0
    %1041 = vmatpush2.msra.mxu0 0.0
    %1042 = vmatprep.subr.mxu0 0.0
    %1043 = vmatpush2.msra.mxu0 0.0
    %1044 = vmatprep.subr.mxu0 0.0
    %1045 = vmatpush2.msra.mxu0 0.0
    %1046 = vmatprep.subr.mxu0 0.0
    %1047 = vmatpush2.msra.mxu0 0.0
    %1048 = vmatprep.subr.mxu0 0.0
    %1049 = vmatpush2.msra.mxu0 0.0
    %1050 = vmatprep.subr.mxu0 0.0
    %1051 = vmatpush2.msra.mxu0 0.0
    %1052 = vmatprep.subr.mxu0 0.0
    %1053 = vmatpush2.msra.mxu0 0.0
    %1054 = vmatprep.subr.mxu0 0.0
    %1055 = vmatpush2.msra.mxu0 0.0
    %1056 = vmatprep.subr.mxu0 0.0
    %1057 = vmatpush2.msra.mxu0 0.0
    %1058 = vmatprep.subr.mxu0 0.0
    %1059 = vmatpush2.msra.mxu0 0.0
    %1060 = vmatprep.subr.mxu0 0.0
    %1061 = vmatpush2.msra.mxu0 0.0
    %1062 = vmatprep.mubr.f32.mxu0 0.0
    %1063 = vmatmul.mubr.f32.gmra.mxu0 %v996
    %v1064 = vpop.f32.mrf.mxu0
    %v1065 = vadd.f32 %v992, %v1064
    %v1066 = vpop.f32.mrf.mxu0
    %1067 = vdwg.mxu0
    %vm1068 = vcmask 60416
    %v1069 = vsel %vm1068, %v1065, -inf
    %1070 = vmax.xlane.f32.xlu0 %v1069
    %v1071 = vpop.xlane.xlu0 %1070
    %v1072 = vsub.f32 %v1065, %v1071
    %v1073 = vmul.f32 %v1072, 1.442695
    %v1074 = vpow.pop %v1073
    %v1075 = vsel %vm1068, %v1074, 0.0
    %1076 = vadd.xlane.f32.xlu0 %v1075
    %v1077 = vpop.xlane.xlu0 %1076
    %v1078 = vrcp.pop %v1077
    %v1079 = vmul.f32 %v1074, %v1078
    %1080 = vst.msk [vmem:[#allocation4] sm:$0xf] %vm1068, %v1079
    // Predicated region
    $region38: #{tpu_custom_call.1} parent=1 // pred_check
      _
    $region39: #{tpu_custom_call.1} parent=1 // pred_check_branch
      %1082 = sbr.rel (0) target = $region41
    $region40: #{tpu_custom_call.1} parent=1 // pred_region
      %s1084 = ssub.s32 64, 64
      %1085 = vsyncadd [#allocation3], %s1084
      %s1087 = sshll.u32 [#allocation2], 4
      %s1088 = int_to_ptr.vmem [resolvable:$true] %s1087
      %1090 = dma.vmem_to_hbm [thread:$0]  %s1088, 64, %s9, [#allocation3]
    $region41: #{tpu_custom_call.1} parent=1 // pred_fallthru
      _
    // Predicated region
    $region42: #{tpu_custom_call.1} parent=1 // pred_check
      _
    $region43: #{tpu_custom_call.1} parent=1 // pred_check_branch
      %1092 = sbr.rel (0) target = $region45
    $region44: #{tpu_custom_call.1} parent=1 // pred_region
      %s1094 = ssub.s32 64, 64
      %1095 = vsyncadd [#allocation5], %s1094
      %s1097 = sshll.u32 [#allocation4], 4
      %s1098 = int_to_ptr.vmem [resolvable:$true] %s1097
      %1100 = dma.vmem_to_hbm [thread:$0]  %s1098, 64, %s10, [#allocation5]
    $region45: #{tpu_custom_call.1} parent=1 // pred_fallthru
      _
    // Predicated region
    $region46: #{tpu_custom_call.1} parent=1 // pred_check
      _
    $region47: #{tpu_custom_call.1} parent=1 // pred_check_branch
      %1102 = sbr.rel (0) target = $region49
    $region48: #{tpu_custom_call.1} parent=1 // pred_region
      %1103 = dma.done [#allocation3], 64
    $region49: #{tpu_custom_call.1} parent=1 // pred_fallthru
      _
    // Predicated region
    $region50: #{tpu_custom_call.1} parent=1 // pred_check
      _
    $region51: #{tpu_custom_call.1} parent=1 // pred_check_branch
      %1105 = sbr.rel (0) target = $region53
    $region52: #{tpu_custom_call.1} parent=1 // pred_region
      %1106 = dma.done [#allocation5], 64
    $region53: #{tpu_custom_call.1} parent=1 // pred_fallthru
      _
    %1107 = vsyncpa [#allocation3], 1
    %1108 = vsyncpa [#allocation5], 1

</llo_original>
